<compile_context>
chip_gen: v7x
topology: tpu7x:2x2x1
jax: 0.10.0
libtpu: 0.0.40
codegen_flags: <defaults>
</compile_context>

<pallas_src>
import jax
import jax.numpy as jnp
from jax.experimental import pallas as pl
from jax.experimental.pallas import tpu as pltpu  # noqa: F401  (TPU-specific knobs)

EPS = 1e-5


def bn_relu_conv1x1_kernel(x_ref, gamma_ref, beta_ref, w_ref, o_ref):
    # x_ref:     (Cin, M)    channels-first slab (M = N*H*W)
    # gamma_ref: (Cin, 1)    BN affine scale
    # beta_ref:  (Cin, 1)    BN affine shift
    # w_ref:     (Cout, Cin) 1x1 conv weight
    # o_ref:     (Cout, M)
    x = x_ref[...].astype(jnp.float32)                        # (Cin, M)
    m = x.shape[1]
    inv_m = 1.0 / m

    # Training-mode BatchNorm2d stats over (N,H,W) == axis -1, single pass:
    #   mean = E[x],  var = E[x^2] - mean^2  (biased, as PyTorch normalizes with).
    # Cross-lane reductions go to the XLU slot; they overlap with VPU work.
    s1 = jnp.sum(x, axis=1, keepdims=True)                    # (Cin, 1)
    s2 = jnp.sum(x * x, axis=1, keepdims=True)                # (Cin, 1)
    mean = s1 * inv_m
    var = jnp.maximum(s2 * inv_m - mean * mean, 0.0)
    inv_std = jax.lax.rsqrt(var + EPS)                        # EUP slot

    # Fold BN into per-channel scale/shift: y = x*scale + shift.
    scale = gamma_ref[...].astype(jnp.float32) * inv_std      # (Cin, 1)
    shift = beta_ref[...].astype(jnp.float32) - mean * scale  # (Cin, 1)

    # ReLU fused into the MXU operand (no extra VMEM round-trip).
    y = jnp.maximum(x * scale + shift, 0.0)                   # (Cin, M) f32

    # 1x1 conv == (Cout, Cin) @ (Cin, M) -> (Cout, M); lane-dense output store.
    o_ref[...] = jnp.dot(
        w_ref[...].astype(jnp.float32), y, preferred_element_type=jnp.float32
    ).astype(o_ref.dtype)


def bn_relu_conv1x1(x_nchw, gamma, beta, w_oihw):
    """x_nchw: (N, Cin, H, W); w_oihw: (Cout, Cin, 1, 1). Returns (N, Cout, H, W)."""
    N, Cin, H, W = x_nchw.shape
    Cout = w_oihw.shape[0]
    M = N * H * W

    # (N, Cin, H, W) -> (Cin, M).  For N == 1 this is a pure reshape (no data
    # movement); for N > 1 we pay one XLA transpose outside the kernel.
    if N == 1:
        x2d = x_nchw.reshape(Cin, M)
    else:
        x2d = jnp.transpose(x_nchw, (1, 0, 2, 3)).reshape(Cin, M)

    w2d = w_oihw.reshape(Cout, Cin)
    gamma2d = gamma.reshape(Cin, 1)
    beta2d = beta.reshape(Cin, 1)

    cost = pl.CostEstimate(
        flops=2 * M * Cin * Cout + 6 * M * Cin,
        transcendentals=Cin,
        bytes_accessed=(M * Cin + Cin * Cout + 2 * Cin + M * Cout) * 4,
    )

    out2d = pl.pallas_call(
        bn_relu_conv1x1_kernel,
        out_shape=jax.ShapeDtypeStruct((Cout, M), x_nchw.dtype),
        in_specs=[
            pl.BlockSpec((Cin, M), lambda: (0, 0)),
            pl.BlockSpec((Cin, 1), lambda: (0, 0)),
            pl.BlockSpec((Cin, 1), lambda: (0, 0)),
            pl.BlockSpec((Cout, Cin), lambda: (0, 0)),
        ],
        out_specs=pl.BlockSpec((Cout, M), lambda: (0, 0)),
        cost_estimate=cost,
    )(x2d, gamma2d, beta2d, w2d)

    # (Cout, M) -> NCHW.  For N == 1 this is again a pure reshape.
    if N == 1:
        return out2d.reshape(1, Cout, H, W)
    return jnp.transpose(out2d.reshape(Cout, N, H, W), (1, 0, 2, 3))


def reference(x_nchw, gamma, beta, w_oihw):
    # Plain-JAX reference of the same math (training-mode BN over N,H,W).
    mean = jnp.mean(x_nchw, axis=(0, 2, 3), keepdims=True)
    var = jnp.mean((x_nchw - mean) ** 2, axis=(0, 2, 3), keepdims=True)
    y = (x_nchw - mean) * jax.lax.rsqrt(var + EPS)
    y = y * gamma[None, :, None, None] + beta[None, :, None, None]
    y = jnp.maximum(y, 0.0)
    w2d = w_oihw.reshape(w_oihw.shape[0], w_oihw.shape[1])
    return jnp.einsum("nchw,oc->nohw", y, w2d)


if __name__ == "__main__":
    key = jax.random.PRNGKey(0)
    k_x, k_g, k_b, k_w = jax.random.split(key, 4)

    N, Cin, H, W, Cout = 1, 48, 28, 28, 24
    x = jax.random.normal(k_x, (N, Cin, H, W), dtype=jnp.float32)

    # Deterministic parameter init (BN affine + 1x1 conv weight, no bias).
    gamma = 1.0 + 0.1 * jax.random.normal(k_g, (Cin,), dtype=jnp.float32)
    beta = 0.1 * jax.random.normal(k_b, (Cin,), dtype=jnp.float32)
    w = jax.random.normal(k_w, (Cout, Cin, 1, 1), dtype=jnp.float32) * (1.0 / Cin**0.5)

    out = jax.block_until_ready(bn_relu_conv1x1(x, gamma, beta, w))

    ref = reference(x, gamma, beta, w)
    assert out.shape == (N, Cout, H, W)
    assert jnp.allclose(out, ref, atol=1e-4, rtol=1e-4)

    # TODO(synk): running_mean/running_var updates of PyTorch training-mode BN are
    # not emitted; only the forward activation path is implemented.
    print("KERNEL_OK")
</pallas_src>

<mosaic_0001>
module attributes {stable_mosaic.version = 11 : i64} {
  func.func @bn_relu_conv1x1_kernel(%arg0: memref<48x784xf32, #tpu.memory_space<vmem>>, %arg1: memref<48x1xf32, #tpu.memory_space<vmem>>, %arg2: memref<48x1xf32, #tpu.memory_space<vmem>>, %arg3: memref<24x48xf32, #tpu.memory_space<vmem>>, %arg4: memref<24x784xf32, #tpu.memory_space<vmem>>) attributes {dimension_semantics = [], scalar_prefetch = 0 : i64, scratch_operands = 0 : i64, tpu.core_type = #tpu.core_type<tc>} {
    %c0 = arith.constant 0 : index
    %c0_0 = arith.constant 0 : index
    %0 = vector.load %arg0[%c0, %c0_0] : memref<48x784xf32, #tpu.memory_space<vmem>>, vector<48x784xf32>
    %cst = arith.constant dense<0.000000e+00> : vector<48xf32>
    %1 = vector.multi_reduction <add>, %0, %cst [1] : vector<48x784xf32> to vector<48xf32>
    %2 = vector.shape_cast %1 : vector<48xf32> to vector<48x1xf32>
    %3 = arith.mulf %0, %0 : vector<48x784xf32>
    %cst_1 = arith.constant dense<0.000000e+00> : vector<48xf32>
    %4 = vector.multi_reduction <add>, %3, %cst_1 [1] : vector<48x784xf32> to vector<48xf32>
    %5 = vector.shape_cast %4 : vector<48xf32> to vector<48x1xf32>
    %cst_2 = arith.constant 0.00127551018 : f32
    %6 = vector.broadcast %cst_2 : f32 to vector<48x1xf32>
    %7 = arith.mulf %2, %6 : vector<48x1xf32>
    %cst_3 = arith.constant 0.00127551018 : f32
    %8 = vector.broadcast %cst_3 : f32 to vector<48x1xf32>
    %9 = arith.mulf %5, %8 : vector<48x1xf32>
    %10 = arith.mulf %7, %7 : vector<48x1xf32>
    %11 = arith.subf %9, %10 : vector<48x1xf32>
    %cst_4 = arith.constant 0.000000e+00 : f32
    %12 = vector.broadcast %cst_4 : f32 to vector<48x1xf32>
    %13 = arith.maximumf %11, %12 : vector<48x1xf32>
    %cst_5 = arith.constant 9.99999974E-6 : f32
    %14 = vector.broadcast %cst_5 : f32 to vector<48x1xf32>
    %15 = arith.addf %13, %14 : vector<48x1xf32>
    %16 = math.rsqrt %15 : vector<48x1xf32>
    %c0_6 = arith.constant 0 : index
    %c0_7 = arith.constant 0 : index
    %17 = vector.load %arg1[%c0_6, %c0_7] : memref<48x1xf32, #tpu.memory_space<vmem>>, vector<48x1xf32>
    %18 = arith.mulf %17, %16 : vector<48x1xf32>
    %c0_8 = arith.constant 0 : index
    %c0_9 = arith.constant 0 : index
    %19 = vector.load %arg2[%c0_8, %c0_9] : memref<48x1xf32, #tpu.memory_space<vmem>>, vector<48x1xf32>
    %20 = arith.mulf %7, %18 : vector<48x1xf32>
    %21 = arith.subf %19, %20 : vector<48x1xf32>
    %22 = vector.broadcast %18 : vector<48x1xf32> to vector<48x784xf32>
    %23 = arith.mulf %0, %22 : vector<48x784xf32>
    %24 = vector.broadcast %21 : vector<48x1xf32> to vector<48x784xf32>
    %25 = arith.addf %23, %24 : vector<48x784xf32>
    %cst_10 = arith.constant 0.000000e+00 : f32
    %26 = vector.broadcast %cst_10 : f32 to vector<48x784xf32>
    %27 = arith.maximumf %25, %26 : vector<48x784xf32>
    %c0_11 = arith.constant 0 : index
    %c0_12 = arith.constant 0 : index
    %28 = vector.load %arg3[%c0_11, %c0_12] : memref<24x48xf32, #tpu.memory_space<vmem>>, vector<24x48xf32>
    %cst_13 = arith.constant dense<0.000000e+00> : vector<24x784xf32>
    %29 = tpu.matmul %28, %27, %cst_13 {dimension_numbers = #tpu.dot_dimension_numbers<[1], [0], [0], [1], [0, 0, 1, 1], [], []>} : vector<24x48xf32>, vector<48x784xf32>, vector<24x784xf32> -> vector<24x784xf32>
    %c0_14 = arith.constant 0 : index
    %c0_15 = arith.constant 0 : index
    %30 = vector.load %arg4[%c0_14, %c0_15] : memref<24x784xf32, #tpu.memory_space<vmem>>, vector<24x784xf32>
    tpu.vector_store %arg4[%c0_14, %c0_15], %29 {strides = array<i32>} : memref<24x784xf32, #tpu.memory_space<vmem>>, vector<24x784xf32>,
    return
  }
}

</mosaic_0001>

<llo_original>
// kernel: tpu_custom_call.1
$region0: #{tpu_custom_call.1}
  #allocation0 [shape = 'u32[]', space=smem, size = 0x4, offset = 0x4, fixed_abs, tag = 'smem constant byte address 0x4 - core index']
  #allocation1 [shape = 'u32[144,128]{1,0:T(1,128)}', space=vmem, size = 0x12000, scoped, tag = 'internal scratch']
  %s0 = inlined_call_operand.hbm [shape: f32[48,784], index: 0, kind: input, shape index: {}]
  %s1 = inlined_call_operand.vmem [shape: f32[48,1], index: 1, kind: input, shape index: {}]
  %s2 = inlined_call_operand.vmem [shape: f32[48,1], index: 2, kind: input, shape index: {}]
  %s3 = inlined_call_operand.vmem [shape: f32[24,48], index: 3, kind: input, shape index: {}]
  %s4 = inlined_call_operand.hbm [shape: f32[24,784], index: 4, kind: output, shape index: {}]
  %s5 = sld [smem:[#allocation0]]
  $region30: #{tpu_custom_call.1} parent=0
    _
  %s7 = ssub.s32 1, %s5
  %s8 = scalar_select 0, %s7, %s5
  $region1: #{tpu_custom_call.1} parent=0
    #allocation2 [shape = 'u8[172032]{0}', space=vmem, size = 0x2a000, scoped, tag = 'input window, operand 0, single buffered']
    #allocation3 [shape = 's32[1]{0}', space=sflag, size = 0x4, scoped, tag = 'scoped memory for tpu_custom_call.1']
    #allocation4 [shape = 's32[1]{0}', space=sflag, size = 0x4, scoped, tag = 'scoped memory for tpu_custom_call.1']
    #allocation5 [shape = 'u8[86016]{0}', space=vmem, size = 0x15000, scoped, tag = 'output window, operand 0, single buffered']
    %9 = vsyncpa [#allocation3], 0
    %10 = vsyncpa [#allocation4], 0
    // Predicated region
    $region2: #{tpu_custom_call.1} parent=1 // pred_check
      _
    $region3: #{tpu_custom_call.1} parent=1 // pred_check_branch
      %12 = sbr.rel (0) target = $region5
    $region4: #{tpu_custom_call.1} parent=1 // pred_region
      %s14 = ssub.s32 5376, 5376
      %15 = vsyncadd [#allocation3], %s14
      %s16 = sshll.u32 [#allocation2], 4
      %s17 = int_to_ptr.vmem [resolvable:$true] %s16
      %22 = dma.hbm_to_vmem [thread:$0]  %s0, 5376, %s17, [#allocation3], 896, 896, 56
    $region5: #{tpu_custom_call.1} parent=1 // pred_fallthru
      _
    // Predicated region
    $region6: #{tpu_custom_call.1} parent=1 // pred_check
      _
    $region7: #{tpu_custom_call.1} parent=1 // pred_check_branch
      %24 = sbr.rel (0) target = $region9
    $region8: #{tpu_custom_call.1} parent=1 // pred_region
      _
    $region9: #{tpu_custom_call.1} parent=1 // pred_fallthru
      _
    // Predicated region
    $region10: #{tpu_custom_call.1} parent=1 // pred_check
      _
    $region11: #{tpu_custom_call.1} parent=1 // pred_check_branch
      %26 = sbr.rel (0) target = $region13
    $region12: #{tpu_custom_call.1} parent=1 // pred_region
      _
    $region13: #{tpu_custom_call.1} parent=1 // pred_fallthru
      _
    // Predicated region
    $region14: #{tpu_custom_call.1} parent=1 // pred_check
      _
    $region15: #{tpu_custom_call.1} parent=1 // pred_check_branch
      %28 = sbr.rel (0) target = $region17
    $region16: #{tpu_custom_call.1} parent=1 // pred_region
      _
    $region17: #{tpu_custom_call.1} parent=1 // pred_fallthru
      _
    // Predicated region
    $region18: #{tpu_custom_call.1} parent=1 // pred_check
      _
    $region19: #{tpu_custom_call.1} parent=1 // pred_check_branch
      %30 = sbr.rel (0) target = $region21
    $region20: #{tpu_custom_call.1} parent=1 // pred_region
      %31 = dma.done [#allocation3], 5376
    $region21: #{tpu_custom_call.1} parent=1 // pred_fallthru
      _
    %v32 = vld [vmem:[#allocation2] sm:$0xff]
    %v33 = vld [vmem:[#allocation2 + $0x8] sm:$0xff]
    %v34 = vld [vmem:[#allocation2 + $0x10] sm:$0xff]
    %v35 = vld [vmem:[#allocation2 + $0x18] sm:$0xff]
    %v36 = vld [vmem:[#allocation2 + $0x20] sm:$0xff]
    %v37 = vld [vmem:[#allocation2 + $0x28] sm:$0xff]
    %v38 = vld [vmem:[#allocation2 + $0x30] sm:$0xff]
    %v39 = vld [vmem:[#allocation2 + $0x38] sm:$0xff]
    %v40 = vld [vmem:[#allocation2 + $0x40] sm:$0xff]
    %v41 = vld [vmem:[#allocation2 + $0x48] sm:$0xff]
    %v42 = vld [vmem:[#allocation2 + $0x50] sm:$0xff]
    %v43 = vld [vmem:[#allocation2 + $0x58] sm:$0xff]
    %v44 = vld [vmem:[#allocation2 + $0x60] sm:$0xff]
    %v45 = vld [vmem:[#allocation2 + $0x68] sm:$0xff]
    %v46 = vld [vmem:[#allocation2 + $0x70] sm:$0xff]
    %v47 = vld [vmem:[#allocation2 + $0x78] sm:$0xff]
    %v48 = vld [vmem:[#allocation2 + $0x80] sm:$0xff]
    %v49 = vld [vmem:[#allocation2 + $0x88] sm:$0xff]
    %v50 = vld [vmem:[#allocation2 + $0x90] sm:$0xff]
    %v51 = vld [vmem:[#allocation2 + $0x98] sm:$0xff]
    %v52 = vld [vmem:[#allocation2 + $0xa0] sm:$0xff]
    %v53 = vld [vmem:[#allocation2 + $0xa8] sm:$0xff]
    %v54 = vld [vmem:[#allocation2 + $0xb0] sm:$0xff]
    %v55 = vld [vmem:[#allocation2 + $0xb8] sm:$0xff]
    %v56 = vld [vmem:[#allocation2 + $0xc0] sm:$0xff]
    %v57 = vld [vmem:[#allocation2 + $0xc8] sm:$0xff]
    %v58 = vld [vmem:[#allocation2 + $0xd0] sm:$0xff]
    %v59 = vld [vmem:[#allocation2 + $0xd8] sm:$0xff]
    %v60 = vld [vmem:[#allocation2 + $0xe0] sm:$0xff]
    %v61 = vld [vmem:[#allocation2 + $0xe8] sm:$0xff]
    %v62 = vld [vmem:[#allocation2 + $0xf0] sm:$0xff]
    %v63 = vld [vmem:[#allocation2 + $0xf8] sm:$0xff]
    %v64 = vld [vmem:[#allocation2 + $0x100] sm:$0xff]
    %v65 = vld [vmem:[#allocation2 + $0x108] sm:$0xff]
    %v66 = vld [vmem:[#allocation2 + $0x110] sm:$0xff]
    %v67 = vld [vmem:[#allocation2 + $0x118] sm:$0xff]
    %v68 = vld [vmem:[#allocation2 + $0x120] sm:$0xff]
    %v69 = vld [vmem:[#allocation2 + $0x128] sm:$0xff]
    %v70 = vld [vmem:[#allocation2 + $0x130] sm:$0xff]
    %v71 = vld [vmem:[#allocation2 + $0x138] sm:$0xff]
    %v72 = vld [vmem:[#allocation2 + $0x140] sm:$0xff]
    %v73 = vld [vmem:[#allocation2 + $0x148] sm:$0xff]
    %v74 = vadd.f32 %v32, %v33
    %v75 = vadd.f32 %v74, %v34
    %v76 = vadd.f32 %v75, %v35
    %v77 = vadd.f32 %v76, %v36
    %v78 = vadd.f32 %v77, %v37
    %vm79 = vcmask 130048
    %v80 = vsel %vm79, %v38, 0.0
    %v81 = vadd.f32 %v78, %v80
    %82 = vadd.xlane.f32.xlu0 %v81
    %v83 = vpop.xlane.xlu0 %82
    %v84 = vadd.f32 %v39, %v40
    %v85 = vadd.f32 %v84, %v41
    %v86 = vadd.f32 %v85, %v42
    %v87 = vadd.f32 %v86, %v43
    %v88 = vadd.f32 %v87, %v44
    %v89 = vsel %vm79, %v45, 0.0
    %v90 = vadd.f32 %v88, %v89
    %91 = vadd.xlane.f32.xlu0 %v90
    %v92 = vpop.xlane.xlu0 %91
    %v93 = vadd.f32 %v46, %v47
    %v94 = vadd.f32 %v93, %v48
    %v95 = vadd.f32 %v94, %v49
    %v96 = vadd.f32 %v95, %v50
    %v97 = vadd.f32 %v96, %v51
    %v98 = vsel %vm79, %v52, 0.0
    %v99 = vadd.f32 %v97, %v98
    %100 = vadd.xlane.f32.xlu0 %v99
    %v101 = vpop.xlane.xlu0 %100
    %v102 = vadd.f32 %v53, %v54
    %v103 = vadd.f32 %v102, %v55
    %v104 = vadd.f32 %v103, %v56
    %v105 = vadd.f32 %v104, %v57
    %v106 = vadd.f32 %v105, %v58
    %v107 = vsel %vm79, %v59, 0.0
    %v108 = vadd.f32 %v106, %v107
    %109 = vadd.xlane.f32.xlu0 %v108
    %v110 = vpop.xlane.xlu0 %109
    %v111 = vadd.f32 %v60, %v61
    %v112 = vadd.f32 %v111, %v62
    %v113 = vadd.f32 %v112, %v63
    %v114 = vadd.f32 %v113, %v64
    %v115 = vadd.f32 %v114, %v65
    %v116 = vsel %vm79, %v66, 0.0
    %v117 = vadd.f32 %v115, %v116
    %118 = vadd.xlane.f32.xlu0 %v117
    %v119 = vpop.xlane.xlu0 %118
    %v120 = vadd.f32 %v67, %v68
    %v121 = vadd.f32 %v120, %v69
    %v122 = vadd.f32 %v121, %v70
    %v123 = vadd.f32 %v122, %v71
    %v124 = vadd.f32 %v123, %v72
    %v125 = vsel %vm79, %v73, 0.0
    %v126 = vadd.f32 %v124, %v125
    %127 = vadd.xlane.f32.xlu0 %v126
    %v128 = vpop.xlane.xlu0 %127
    %v129 = vmul.f32 %v32, %v32
    %v130 = vmul.f32 %v33, %v33
    %v131 = vmul.f32 %v34, %v34
    %v132 = vmul.f32 %v35, %v35
    %v133 = vmul.f32 %v36, %v36
    %v134 = vmul.f32 %v37, %v37
    %v135 = vmul.f32 %v38, %v38
    %v136 = vmul.f32 %v39, %v39
    %v137 = vmul.f32 %v40, %v40
    %v138 = vmul.f32 %v41, %v41
    %v139 = vmul.f32 %v42, %v42
    %v140 = vmul.f32 %v43, %v43
    %v141 = vmul.f32 %v44, %v44
    %v142 = vmul.f32 %v45, %v45
    %v143 = vmul.f32 %v46, %v46
    %v144 = vmul.f32 %v47, %v47
    %v145 = vmul.f32 %v48, %v48
    %v146 = vmul.f32 %v49, %v49
    %v147 = vmul.f32 %v50, %v50
    %v148 = vmul.f32 %v51, %v51
    %v149 = vmul.f32 %v52, %v52
    %v150 = vmul.f32 %v53, %v53
    %v151 = vmul.f32 %v54, %v54
    %v152 = vmul.f32 %v55, %v55
    %v153 = vmul.f32 %v56, %v56
    %v154 = vmul.f32 %v57, %v57
    %v155 = vmul.f32 %v58, %v58
    %v156 = vmul.f32 %v59, %v59
    %v157 = vmul.f32 %v60, %v60
    %v158 = vmul.f32 %v61, %v61
    %v159 = vmul.f32 %v62, %v62
    %v160 = vmul.f32 %v63, %v63
    %v161 = vmul.f32 %v64, %v64
    %v162 = vmul.f32 %v65, %v65
    %v163 = vmul.f32 %v66, %v66
    %v164 = vmul.f32 %v67, %v67
    %v165 = vmul.f32 %v68, %v68
    %v166 = vmul.f32 %v69, %v69
    %v167 = vmul.f32 %v70, %v70
    %v168 = vmul.f32 %v71, %v71
    %v169 = vmul.f32 %v72, %v72
    %v170 = vmul.f32 %v73, %v73
    %v171 = vadd.f32 %v129, %v130
    %v172 = vadd.f32 %v171, %v131
    %v173 = vadd.f32 %v172, %v132
    %v174 = vadd.f32 %v173, %v133
    %v175 = vadd.f32 %v174, %v134
    %v176 = vsel %vm79, %v135, 0.0
    %v177 = vadd.f32 %v175, %v176
    %178 = vadd.xlane.f32.xlu0 %v177
    %v179 = vpop.xlane.xlu0 %178
    %v180 = vadd.f32 %v136, %v137
    %v181 = vadd.f32 %v180, %v138
    %v182 = vadd.f32 %v181, %v139
    %v183 = vadd.f32 %v182, %v140
    %v184 = vadd.f32 %v183, %v141
    %v185 = vsel %vm79, %v142, 0.0
    %v186 = vadd.f32 %v184, %v185
    %187 = vadd.xlane.f32.xlu0 %v186
    %v188 = vpop.xlane.xlu0 %187
    %v189 = vadd.f32 %v143, %v144
    %v190 = vadd.f32 %v189, %v145
    %v191 = vadd.f32 %v190, %v146
    %v192 = vadd.f32 %v191, %v147
    %v193 = vadd.f32 %v192, %v148
    %v194 = vsel %vm79, %v149, 0.0
    %v195 = vadd.f32 %v193, %v194
    %196 = vadd.xlane.f32.xlu0 %v195
    %v197 = vpop.xlane.xlu0 %196
    %v198 = vadd.f32 %v150, %v151
    %v199 = vadd.f32 %v198, %v152
    %v200 = vadd.f32 %v199, %v153
    %v201 = vadd.f32 %v200, %v154
    %v202 = vadd.f32 %v201, %v155
    %v203 = vsel %vm79, %v156, 0.0
    %v204 = vadd.f32 %v202, %v203
    %205 = vadd.xlane.f32.xlu0 %v204
    %v206 = vpop.xlane.xlu0 %205
    %v207 = vadd.f32 %v157, %v158
    %v208 = vadd.f32 %v207, %v159
    %v209 = vadd.f32 %v208, %v160
    %v210 = vadd.f32 %v209, %v161
    %v211 = vadd.f32 %v210, %v162
    %v212 = vsel %vm79, %v163, 0.0
    %v213 = vadd.f32 %v211, %v212
    %214 = vadd.xlane.f32.xlu0 %v213
    %v215 = vpop.xlane.xlu0 %214
    %v216 = vadd.f32 %v164, %v165
    %v217 = vadd.f32 %v216, %v166
    %v218 = vadd.f32 %v217, %v167
    %v219 = vadd.f32 %v218, %v168
    %v220 = vadd.f32 %v219, %v169
    %v221 = vsel %vm79, %v170, 0.0
    %v222 = vadd.f32 %v220, %v221
    %223 = vadd.xlane.f32.xlu0 %v222
    %v224 = vpop.xlane.xlu0 %223
    %v225 = vmul.f32 %v83, 0.0012755102
    %v226 = vmul.f32 %v92, 0.0012755102
    %v227 = vmul.f32 %v101, 0.0012755102
    %v228 = vmul.f32 %v110, 0.0012755102
    %v229 = vmul.f32 %v119, 0.0012755102
    %v230 = vmul.f32 %v128, 0.0012755102
    %v231 = vmul.f32 %v179, 0.0012755102
    %v232 = vmul.f32 %v188, 0.0012755102
    %v233 = vmul.f32 %v197, 0.0012755102
    %v234 = vmul.f32 %v206, 0.0012755102
    %v235 = vmul.f32 %v215, 0.0012755102
    %v236 = vmul.f32 %v224, 0.0012755102
    %v237 = vmul.f32 %v225, %v225
    %v238 = vmul.f32 %v226, %v226
    %v239 = vmul.f32 %v227, %v227
    %v240 = vmul.f32 %v228, %v228
    %v241 = vmul.f32 %v229, %v229
    %v242 = vmul.f32 %v230, %v230
    %v243 = vsub.f32 %v231, %v237
    %v244 = vsub.f32 %v232, %v238
    %v245 = vsub.f32 %v233, %v239
    %v246 = vsub.f32 %v234, %v240
    %v247 = vsub.f32 %v235, %v241
    %v248 = vsub.f32 %v236, %v242
    %v249 = vmax.f32 %v243, 0.0
    %v250 = vmax.f32 %v244, 0.0
    %v251 = vmax.f32 %v245, 0.0
    %v252 = vmax.f32 %v246, 0.0
    %v253 = vmax.f32 %v247, 0.0
    %v254 = vmax.f32 %v248, 0.0
    %v255 = vadd.f32 %v249, 1e-05
    %v256 = vadd.f32 %v250, 1e-05
    %v257 = vadd.f32 %v251, 1e-05
    %v258 = vadd.f32 %v252, 1e-05
    %v259 = vadd.f32 %v253, 1e-05
    %v260 = vadd.f32 %v254, 1e-05
    %v261 = vrsqrt.pop %v255
    %v262 = vrsqrt.pop %v256
    %v263 = vrsqrt.pop %v257
    %v264 = vrsqrt.pop %v258
    %v265 = vrsqrt.pop %v259
    %v266 = vrsqrt.pop %v260
    %v267 = vld [vmem:[%s1] sm:$0xff]
    %v268 = vld [vmem:[%s1 + $0x8] sm:$0xff]
    %v269 = vld [vmem:[%s1 + $0x10] sm:$0xff]
    %v270 = vld [vmem:[%s1 + $0x18] sm:$0xff]
    %v271 = vld [vmem:[%s1 + $0x20] sm:$0xff]
    %v272 = vld [vmem:[%s1 + $0x28] sm:$0xff]
    %v273 = vmul.f32 %v267, %v261
    %v274 = vmul.f32 %v268, %v262
    %v275 = vmul.f32 %v269, %v263
    %v276 = vmul.f32 %v270, %v264
    %v277 = vmul.f32 %v271, %v265
    %v278 = vmul.f32 %v272, %v266
    %v279 = vld [vmem:[%s2] sm:$0xff]
    %v280 = vld [vmem:[%s2 + $0x8] sm:$0xff]
    %v281 = vld [vmem:[%s2 + $0x10] sm:$0xff]
    %v282 = vld [vmem:[%s2 + $0x18] sm:$0xff]
    %v283 = vld [vmem:[%s2 + $0x20] sm:$0xff]
    %v284 = vld [vmem:[%s2 + $0x28] sm:$0xff]
    %v285 = vmul.f32 %v225, %v273
    %v286 = vmul.f32 %v226, %v274
    %v287 = vmul.f32 %v227, %v275
    %v288 = vmul.f32 %v228, %v276
    %v289 = vmul.f32 %v229, %v277
    %v290 = vmul.f32 %v230, %v278
    %v291 = vsub.f32 %v279, %v285
    %v292 = vsub.f32 %v280, %v286
    %v293 = vsub.f32 %v281, %v287
    %v294 = vsub.f32 %v282, %v288
    %v295 = vsub.f32 %v283, %v289
    %v296 = vsub.f32 %v284, %v290
    %298 = vset.pattern.permute.xlu0 0
    %299 = vperm.xlu0 %298, %v273
    %v300 = vpop.permute.xlu0 %299
    %303 = vset.pattern.permute.xlu0 0
    %304 = vperm.xlu0 %303, %v274
    %v305 = vpop.permute.xlu0 %304
    %308 = vset.pattern.permute.xlu0 0
    %309 = vperm.xlu0 %308, %v275
    %v310 = vpop.permute.xlu0 %309
    %313 = vset.pattern.permute.xlu0 0
    %314 = vperm.xlu0 %313, %v276
    %v315 = vpop.permute.xlu0 %314
    %318 = vset.pattern.permute.xlu0 0
    %319 = vperm.xlu0 %318, %v277
    %v320 = vpop.permute.xlu0 %319
    %323 = vset.pattern.permute.xlu0 0
    %324 = vperm.xlu0 %323, %v278
    %v325 = vpop.permute.xlu0 %324
    %v327 = vmul.f32 %v32, %v300
    %v328 = vmul.f32 %v33, %v300
    %v329 = vmul.f32 %v34, %v300
    %v330 = vmul.f32 %v35, %v300
    %v331 = vmul.f32 %v36, %v300
    %v332 = vmul.f32 %v37, %v300
    %v333 = vmul.f32 %v38, %v300
    %v334 = vmul.f32 %v39, %v305
    %v335 = vmul.f32 %v40, %v305
    %v336 = vmul.f32 %v41, %v305
    %v337 = vmul.f32 %v42, %v305
    %v338 = vmul.f32 %v43, %v305
    %v339 = vmul.f32 %v44, %v305
    %v340 = vmul.f32 %v45, %v305
    %v341 = vmul.f32 %v46, %v310
    %v342 = vmul.f32 %v47, %v310
    %v343 = vmul.f32 %v48, %v310
    %v344 = vmul.f32 %v49, %v310
    %v345 = vmul.f32 %v50, %v310
    %v346 = vmul.f32 %v51, %v310
    %v347 = vmul.f32 %v52, %v310
    %v348 = vmul.f32 %v53, %v315
    %v349 = vmul.f32 %v54, %v315
    %v350 = vmul.f32 %v55, %v315
    %v351 = vmul.f32 %v56, %v315
    %v352 = vmul.f32 %v57, %v315
    %v353 = vmul.f32 %v58, %v315
    %v354 = vmul.f32 %v59, %v315
    %v355 = vmul.f32 %v60, %v320
    %v356 = vmul.f32 %v61, %v320
    %v357 = vmul.f32 %v62, %v320
    %v358 = vmul.f32 %v63, %v320
    %v359 = vmul.f32 %v64, %v320
    %v360 = vmul.f32 %v65, %v320
    %v361 = vmul.f32 %v66, %v320
    %v362 = vmul.f32 %v67, %v325
    %v363 = vmul.f32 %v68, %v325
    %v364 = vmul.f32 %v69, %v325
    %v365 = vmul.f32 %v70, %v325
    %v366 = vmul.f32 %v71, %v325
    %v367 = vmul.f32 %v72, %v325
    %v368 = vmul.f32 %v73, %v325
    %370 = vset.pattern.permute.xlu0 0
    %371 = vperm.xlu0 %370, %v291
    %v372 = vpop.permute.xlu0 %371
    %375 = vset.pattern.permute.xlu0 0
    %376 = vperm.xlu0 %375, %v292
    %v377 = vpop.permute.xlu0 %376
    %380 = vset.pattern.permute.xlu0 0
    %381 = vperm.xlu0 %380, %v293
    %v382 = vpop.permute.xlu0 %381
    %385 = vset.pattern.permute.xlu0 0
    %386 = vperm.xlu0 %385, %v294
    %v387 = vpop.permute.xlu0 %386
    %390 = vset.pattern.permute.xlu0 0
    %391 = vperm.xlu0 %390, %v295
    %v392 = vpop.permute.xlu0 %391
    %395 = vset.pattern.permute.xlu0 0
    %396 = vperm.xlu0 %395, %v296
    %v397 = vpop.permute.xlu0 %396
    %v399 = vadd.f32 %v327, %v372
    %v400 = vadd.f32 %v328, %v372
    %v401 = vadd.f32 %v329, %v372
    %v402 = vadd.f32 %v330, %v372
    %v403 = vadd.f32 %v331, %v372
    %v404 = vadd.f32 %v332, %v372
    %v405 = vadd.f32 %v333, %v372
    %v406 = vadd.f32 %v334, %v377
    %v407 = vadd.f32 %v335, %v377
    %v408 = vadd.f32 %v336, %v377
    %v409 = vadd.f32 %v337, %v377
    %v410 = vadd.f32 %v338, %v377
    %v411 = vadd.f32 %v339, %v377
    %v412 = vadd.f32 %v340, %v377
    %v413 = vadd.f32 %v341, %v382
    %v414 = vadd.f32 %v342, %v382
    %v415 = vadd.f32 %v343, %v382
    %v416 = vadd.f32 %v344, %v382
    %v417 = vadd.f32 %v345, %v382
    %v418 = vadd.f32 %v346, %v382
    %v419 = vadd.f32 %v347, %v382
    %v420 = vadd.f32 %v348, %v387
    %v421 = vadd.f32 %v349, %v387
    %v422 = vadd.f32 %v350, %v387
    %v423 = vadd.f32 %v351, %v387
    %v424 = vadd.f32 %v352, %v387
    %v425 = vadd.f32 %v353, %v387
    %v426 = vadd.f32 %v354, %v387
    %v427 = vadd.f32 %v355, %v392
    %v428 = vadd.f32 %v356, %v392
    %v429 = vadd.f32 %v357, %v392
    %v430 = vadd.f32 %v358, %v392
    %v431 = vadd.f32 %v359, %v392
    %v432 = vadd.f32 %v360, %v392
    %v433 = vadd.f32 %v361, %v392
    %v434 = vadd.f32 %v362, %v397
    %v435 = vadd.f32 %v363, %v397
    %v436 = vadd.f32 %v364, %v397
    %v437 = vadd.f32 %v365, %v397
    %v438 = vadd.f32 %v366, %v397
    %v439 = vadd.f32 %v367, %v397
    %v440 = vadd.f32 %v368, %v397
    %v441 = vmax.f32 %v399, 0.0
    %v442 = vmax.f32 %v400, 0.0
    %v443 = vmax.f32 %v401, 0.0
    %v444 = vmax.f32 %v402, 0.0
    %v445 = vmax.f32 %v403, 0.0
    %v446 = vmax.f32 %v404, 0.0
    %v447 = vmax.f32 %v405, 0.0
    %v448 = vmax.f32 %v406, 0.0
    %v449 = vmax.f32 %v407, 0.0
    %v450 = vmax.f32 %v408, 0.0
    %v451 = vmax.f32 %v409, 0.0
    %v452 = vmax.f32 %v410, 0.0
    %v453 = vmax.f32 %v411, 0.0
    %v454 = vmax.f32 %v412, 0.0
    %v455 = vmax.f32 %v413, 0.0
    %v456 = vmax.f32 %v414, 0.0
    %v457 = vmax.f32 %v415, 0.0
    %v458 = vmax.f32 %v416, 0.0
    %v459 = vmax.f32 %v417, 0.0
    %v460 = vmax.f32 %v418, 0.0
    %v461 = vmax.f32 %v419, 0.0
    %v462 = vmax.f32 %v420, 0.0
    %v463 = vmax.f32 %v421, 0.0
    %v464 = vmax.f32 %v422, 0.0
    %v465 = vmax.f32 %v423, 0.0
    %v466 = vmax.f32 %v424, 0.0
    %v467 = vmax.f32 %v425, 0.0
    %v468 = vmax.f32 %v426, 0.0
    %v469 = vmax.f32 %v427, 0.0
    %v470 = vmax.f32 %v428, 0.0
    %v471 = vmax.f32 %v429, 0.0
    %v472 = vmax.f32 %v430, 0.0
    %v473 = vmax.f32 %v431, 0.0
    %v474 = vmax.f32 %v432, 0.0
    %v475 = vmax.f32 %v433, 0.0
    %v476 = vmax.f32 %v434, 0.0
    %v477 = vmax.f32 %v435, 0.0
    %v478 = vmax.f32 %v436, 0.0
    %v479 = vmax.f32 %v437, 0.0
    %v480 = vmax.f32 %v438, 0.0
    %v481 = vmax.f32 %v439, 0.0
    %v482 = vmax.f32 %v440, 0.0
    %v483 = vld [vmem:[%s3] sm:$0xff]
    %v484 = vld [vmem:[%s3 + $0x8] sm:$0xff]
    %v485 = vld [vmem:[%s3 + $0x10] sm:$0xff]
    %vm486 = vcmask 392192
    %v488 = vsel %vm486, %v483, 0
    %v491 = vsel %vm486, %v484, 0
    %v494 = vsel %vm486, %v485, 0
    %496 = vmatprep.subr.mxu0 %v442
    %497 = vmatpush1.msra.mxu0 %v441
    %498 = vmatprep.subr.mxu0 %v449
    %499 = vmatpush1.msra.mxu0 %v448
    %500 = vmatprep.subr.mxu0 %v456
    %501 = vmatpush1.msra.mxu0 %v455
    %502 = vmatprep.subr.mxu0 %v463
    %503 = vmatpush1.msra.mxu0 %v462
    %504 = vmatprep.subr.mxu0 %v470
    %505 = vmatpush1.msra.mxu0 %v469
    %506 = vmatprep.subr.mxu0 %v477
    %507 = vmatpush1.msra.mxu0 %v476
    %508 = vmatprep.subr.mxu0 0.0
    %509 = vmatpush1.msra.mxu0 0.0
    %510 = vmatprep.subr.mxu0 0.0
    %511 = vmatpush1.msra.mxu0 0.0
    %512 = vmatprep.subr.mxu0 0.0
    %513 = vmatpush1.msra.mxu0 0.0
    %514 = vmatprep.subr.mxu0 0.0
    %515 = vmatpush1.msra.mxu0 0.0
    %516 = vmatprep.subr.mxu0 0.0
    %517 = vmatpush1.msra.mxu0 0.0
    %518 = vmatprep.subr.mxu0 0.0
    %519 = vmatpush1.msra.mxu0 0.0
    %520 = vmatprep.subr.mxu0 0.0
    %521 = vmatpush1.msra.mxu0 0.0
    %522 = vmatprep.subr.mxu0 0.0
    %523 = vmatpush1.msra.mxu0 0.0
    %524 = vmatprep.subr.mxu0 0.0
    %525 = vmatpush1.msra.mxu0 0.0
    %526 = vmatprep.subr.mxu0 0.0
    %527 = vmatpush1.msra.mxu0 0.0
    %528 = vmatprep.subr.mxu0 0.0
    %529 = vmatpush1.msra.mxu0 0.0
    %530 = vmatprep.subr.mxu0 0.0
    %531 = vmatpush1.msra.mxu0 0.0
    %532 = vmatprep.subr.mxu0 0.0
    %533 = vmatpush1.msra.mxu0 0.0
    %534 = vmatprep.subr.mxu0 0.0
    %535 = vmatpush1.msra.mxu0 0.0
    %536 = vmatprep.subr.mxu0 0.0
    %537 = vmatpush1.msra.mxu0 0.0
    %538 = vmatprep.subr.mxu0 0.0
    %539 = vmatpush1.msra.mxu0 0.0
    %540 = vmatprep.subr.mxu0 0.0
    %541 = vmatpush1.msra.mxu0 0.0
    %542 = vmatprep.subr.mxu0 0.0
    %543 = vmatpush1.msra.mxu0 0.0
    %544 = vmatprep.subr.mxu0 0.0
    %545 = vmatpush1.msra.mxu0 0.0
    %546 = vmatprep.subr.mxu0 0.0
    %547 = vmatpush1.msra.mxu0 0.0
    %548 = vmatprep.subr.mxu0 0.0
    %549 = vmatpush1.msra.mxu0 0.0
    %550 = vmatprep.subr.mxu0 0.0
    %551 = vmatpush1.msra.mxu0 0.0
    %552 = vmatprep.subr.mxu0 0.0
    %553 = vmatpush1.msra.mxu0 0.0
    %554 = vmatprep.subr.mxu0 0.0
    %555 = vmatpush1.msra.mxu0 0.0
    %556 = vmatprep.subr.mxu0 0.0
    %557 = vmatpush1.msra.mxu0 0.0
    %558 = vmatprep.subr.mxu0 0.0
    %559 = vmatpush1.msra.mxu0 0.0
    %560 = vmatprep.mubr.f32.mxu0 0.0
    %561 = vmatmul.mubr.f32.gmra.mrb[0].mxu0 %v488
    %v562 = vpop.f32.mrb[0].mxu0
    %v563 = vadd.f32 0.0, %v562
    %v564 = vpop.f32.mrb[0].mxu0
    %v565 = vadd.f32 0.0, %v564
    %566 = vmatprep.mubr.f32.mxu0 0.0
    %567 = vmatmul.mubr.f32.gmra.mrb[0].mxu0 %v491
    %v568 = vpop.f32.mrb[0].mxu0
    %v569 = vadd.f32 0.0, %v568
    %v570 = vpop.f32.mrb[0].mxu0
    %v571 = vadd.f32 0.0, %v570
    %572 = vmatprep.mubr.f32.mxu0 0.0
    %573 = vmatmul.mubr.f32.gmra.mrb[0].mxu0 %v494
    %v574 = vpop.f32.mrb[0].mxu0
    %v575 = vadd.f32 0.0, %v574
    %v576 = vpop.f32.mrb[0].mxu0
    %v577 = vadd.f32 0.0, %v576
    %578 = vdwg.mxu0
    %579 = vmatprep.subr.mxu0 %v444
    %580 = vmatpush1.msra.mxu0 %v443
    %581 = vmatprep.subr.mxu0 %v451
    %582 = vmatpush1.msra.mxu0 %v450
    %583 = vmatprep.subr.mxu0 %v458
    %584 = vmatpush1.msra.mxu0 %v457
    %585 = vmatprep.subr.mxu0 %v465
    %586 = vmatpush1.msra.mxu0 %v464
    %587 = vmatprep.subr.mxu0 %v472
    %588 = vmatpush1.msra.mxu0 %v471
    %589 = vmatprep.subr.mxu0 %v479
    %590 = vmatpush1.msra.mxu0 %v478
    %591 = vmatprep.subr.mxu0 0.0
    %592 = vmatpush1.msra.mxu0 0.0
    %593 = vmatprep.subr.mxu0 0.0
    %594 = vmatpush1.msra.mxu0 0.0
    %595 = vmatprep.subr.mxu0 0.0
    %596 = vmatpush1.msra.mxu0 0.0
    %597 = vmatprep.subr.mxu0 0.0
    %598 = vmatpush1.msra.mxu0 0.0
    %599 = vmatprep.subr.mxu0 0.0
    %600 = vmatpush1.msra.mxu0 0.0
    %601 = vmatprep.subr.mxu0 0.0
    %602 = vmatpush1.msra.mxu0 0.0
    %603 = vmatprep.subr.mxu0 0.0
    %604 = vmatpush1.msra.mxu0 0.0
    %605 = vmatprep.subr.mxu0 0.0
    %606 = vmatpush1.msra.mxu0 0.0
    %607 = vmatprep.subr.mxu0 0.0
    %608 = vmatpush1.msra.mxu0 0.0
    %609 = vmatprep.subr.mxu0 0.0
    %610 = vmatpush1.msra.mxu0 0.0
    %611 = vmatprep.subr.mxu0 0.0
    %612 = vmatpush1.msra.mxu0 0.0
    %613 = vmatprep.subr.mxu0 0.0
    %614 = vmatpush1.msra.mxu0 0.0
    %615 = vmatprep.subr.mxu0 0.0
    %616 = vmatpush1.msra.mxu0 0.0
    %617 = vmatprep.subr.mxu0 0.0
    %618 = vmatpush1.msra.mxu0 0.0
    %619 = vmatprep.subr.mxu0 0.0
    %620 = vmatpush1.msra.mxu0 0.0
    %621 = vmatprep.subr.mxu0 0.0
    %622 = vmatpush1.msra.mxu0 0.0
    %623 = vmatprep.subr.mxu0 0.0
    %624 = vmatpush1.msra.mxu0 0.0
    %625 = vmatprep.subr.mxu0 0.0
    %626 = vmatpush1.msra.mxu0 0.0
    %627 = vmatprep.subr.mxu0 0.0
    %628 = vmatpush1.msra.mxu0 0.0
    %629 = vmatprep.subr.mxu0 0.0
    %630 = vmatpush1.msra.mxu0 0.0
    %631 = vmatprep.subr.mxu0 0.0
    %632 = vmatpush1.msra.mxu0 0.0
    %633 = vmatprep.subr.mxu0 0.0
    %634 = vmatpush1.msra.mxu0 0.0
    %635 = vmatprep.subr.mxu0 0.0
    %636 = vmatpush1.msra.mxu0 0.0
    %637 = vmatprep.subr.mxu0 0.0
    %638 = vmatpush1.msra.mxu0 0.0
    %639 = vmatprep.subr.mxu0 0.0
    %640 = vmatpush1.msra.mxu0 0.0
    %641 = vmatprep.subr.mxu0 0.0
    %642 = vmatpush1.msra.mxu0 0.0
    %643 = vmatprep.mubr.f32.mxu0 0.0
    %644 = vmatmul.mubr.f32.gmra.mrb[0].mxu0 %v488
    %v645 = vpop.f32.mrb[0].mxu0
    %v646 = vadd.f32 0.0, %v645
    %v647 = vpop.f32.mrb[0].mxu0
    %v648 = vadd.f32 0.0, %v647
    %649 = vmatprep.mubr.f32.mxu0 0.0
    %650 = vmatmul.mubr.f32.gmra.mrb[0].mxu0 %v491
    %v651 = vpop.f32.mrb[0].mxu0
    %v652 = vadd.f32 0.0, %v651
    %v653 = vpop.f32.mrb[0].mxu0
    %v654 = vadd.f32 0.0, %v653
    %655 = vmatprep.mubr.f32.mxu0 0.0
    %656 = vmatmul.mubr.f32.gmra.mrb[0].mxu0 %v494
    %v657 = vpop.f32.mrb[0].mxu0
    %v658 = vadd.f32 0.0, %v657
    %v659 = vpop.f32.mrb[0].mxu0
    %v660 = vadd.f32 0.0, %v659
    %661 = vdwg.mxu0
    %662 = vmatprep.subr.mxu0 %v446
    %663 = vmatpush1.msra.mxu0 %v445
    %664 = vmatprep.subr.mxu0 %v453
    %665 = vmatpush1.msra.mxu0 %v452
    %666 = vmatprep.subr.mxu0 %v460
    %667 = vmatpush1.msra.mxu0 %v459
    %668 = vmatprep.subr.mxu0 %v467
    %669 = vmatpush1.msra.mxu0 %v466
    %670 = vmatprep.subr.mxu0 %v474
    %671 = vmatpush1.msra.mxu0 %v473
    %672 = vmatprep.subr.mxu0 %v481
    %673 = vmatpush1.msra.mxu0 %v480
    %674 = vmatprep.subr.mxu0 0.0
    %675 = vmatpush1.msra.mxu0 0.0
    %676 = vmatprep.subr.mxu0 0.0
    %677 = vmatpush1.msra.mxu0 0.0
    %678 = vmatprep.subr.mxu0 0.0
    %679 = vmatpush1.msra.mxu0 0.0
    %680 = vmatprep.subr.mxu0 0.0
    %681 = vmatpush1.msra.mxu0 0.0
    %682 = vmatprep.subr.mxu0 0.0
    %683 = vmatpush1.msra.mxu0 0.0
    %684 = vmatprep.subr.mxu0 0.0
    %685 = vmatpush1.msra.mxu0 0.0
    %686 = vmatprep.subr.mxu0 0.0
    %687 = vmatpush1.msra.mxu0 0.0
    %688 = vmatprep.subr.mxu0 0.0
    %689 = vmatpush1.msra.mxu0 0.0
    %690 = vmatprep.subr.mxu0 0.0
    %691 = vmatpush1.msra.mxu0 0.0
    %692 = vmatprep.subr.mxu0 0.0
    %693 = vmatpush1.msra.mxu0 0.0
    %694 = vmatprep.subr.mxu0 0.0
    %695 = vmatpush1.msra.mxu0 0.0
    %696 = vmatprep.subr.mxu0 0.0
    %697 = vmatpush1.msra.mxu0 0.0
    %698 = vmatprep.subr.mxu0 0.0
    %699 = vmatpush1.msra.mxu0 0.0
    %700 = vmatprep.subr.mxu0 0.0
    %701 = vmatpush1.msra.mxu0 0.0
    %702 = vmatprep.subr.mxu0 0.0
    %703 = vmatpush1.msra.mxu0 0.0
    %704 = vmatprep.subr.mxu0 0.0
    %705 = vmatpush1.msra.mxu0 0.0
    %706 = vmatprep.subr.mxu0 0.0
    %707 = vmatpush1.msra.mxu0 0.0
    %708 = vmatprep.subr.mxu0 0.0
    %709 = vmatpush1.msra.mxu0 0.0
    %710 = vmatprep.subr.mxu0 0.0
    %711 = vmatpush1.msra.mxu0 0.0
    %712 = vmatprep.subr.mxu0 0.0
    %713 = vmatpush1.msra.mxu0 0.0
    %714 = vmatprep.subr.mxu0 0.0
    %715 = vmatpush1.msra.mxu0 0.0
    %716 = vmatprep.subr.mxu0 0.0
    %717 = vmatpush1.msra.mxu0 0.0
    %718 = vmatprep.subr.mxu0 0.0
    %719 = vmatpush1.msra.mxu0 0.0
    %720 = vmatprep.subr.mxu0 0.0
    %721 = vmatpush1.msra.mxu0 0.0
    %722 = vmatprep.subr.mxu0 0.0
    %723 = vmatpush1.msra.mxu0 0.0
    %724 = vmatprep.subr.mxu0 0.0
    %725 = vmatpush1.msra.mxu0 0.0
    %726 = vmatprep.mubr.f32.mxu0 0.0
    %727 = vmatmul.mubr.f32.gmra.mrb[0].mxu0 %v488
    %v728 = vpop.f32.mrb[0].mxu0
    %v729 = vadd.f32 0.0, %v728
    %v730 = vpop.f32.mrb[0].mxu0
    %v731 = vadd.f32 0.0, %v730
    %732 = vmatprep.mubr.f32.mxu0 0.0
    %733 = vmatmul.mubr.f32.gmra.mrb[0].mxu0 %v491
    %v734 = vpop.f32.mrb[0].mxu0
    %v735 = vadd.f32 0.0, %v734
    %v736 = vpop.f32.mrb[0].mxu0
    %v737 = vadd.f32 0.0, %v736
    %738 = vmatprep.mubr.f32.mxu0 0.0
    %739 = vmatmul.mubr.f32.gmra.mrb[0].mxu0 %v494
    %v740 = vpop.f32.mrb[0].mxu0
    %v741 = vadd.f32 0.0, %v740
    %v742 = vpop.f32.mrb[0].mxu0
    %v743 = vadd.f32 0.0, %v742
    %744 = vdwg.mxu0
    %745 = vmatprep.subr.mxu0 0.0
    %746 = vmatpush1.msra.mxu0 %v447
    %747 = vmatprep.subr.mxu0 0.0
    %748 = vmatpush1.msra.mxu0 %v454
    %749 = vmatprep.subr.mxu0 0.0
    %750 = vmatpush1.msra.mxu0 %v461
    %751 = vmatprep.subr.mxu0 0.0
    %752 = vmatpush1.msra.mxu0 %v468
    %753 = vmatprep.subr.mxu0 0.0
    %754 = vmatpush1.msra.mxu0 %v475
    %755 = vmatprep.subr.mxu0 0.0
    %756 = vmatpush1.msra.mxu0 %v482
    %757 = vmatprep.subr.mxu0 0.0
    %758 = vmatpush1.msra.mxu0 0.0
    %759 = vmatprep.subr.mxu0 0.0
    %760 = vmatpush1.msra.mxu0 0.0
    %761 = vmatprep.subr.mxu0 0.0
    %762 = vmatpush1.msra.mxu0 0.0
    %763 = vmatprep.subr.mxu0 0.0
    %764 = vmatpush1.msra.mxu0 0.0
    %765 = vmatprep.subr.mxu0 0.0
    %766 = vmatpush1.msra.mxu0 0.0
    %767 = vmatprep.subr.mxu0 0.0
    %768 = vmatpush1.msra.mxu0 0.0
    %769 = vmatprep.subr.mxu0 0.0
    %770 = vmatpush1.msra.mxu0 0.0
    %771 = vmatprep.subr.mxu0 0.0
    %772 = vmatpush1.msra.mxu0 0.0
    %773 = vmatprep.subr.mxu0 0.0
    %774 = vmatpush1.msra.mxu0 0.0
    %775 = vmatprep.subr.mxu0 0.0
    %776 = vmatpush1.msra.mxu0 0.0
    %777 = vmatprep.subr.mxu0 0.0
    %778 = vmatpush1.msra.mxu0 0.0
    %779 = vmatprep.subr.mxu0 0.0
    %780 = vmatpush1.msra.mxu0 0.0
    %781 = vmatprep.subr.mxu0 0.0
    %782 = vmatpush1.msra.mxu0 0.0
    %783 = vmatprep.subr.mxu0 0.0
    %784 = vmatpush1.msra.mxu0 0.0
    %785 = vmatprep.subr.mxu0 0.0
    %786 = vmatpush1.msra.mxu0 0.0
    %787 = vmatprep.subr.mxu0 0.0
    %788 = vmatpush1.msra.mxu0 0.0
    %789 = vmatprep.subr.mxu0 0.0
    %790 = vmatpush1.msra.mxu0 0.0
    %791 = vmatprep.subr.mxu0 0.0
    %792 = vmatpush1.msra.mxu0 0.0
    %793 = vmatprep.subr.mxu0 0.0
    %794 = vmatpush1.msra.mxu0 0.0
    %795 = vmatprep.subr.mxu0 0.0
    %796 = vmatpush1.msra.mxu0 0.0
    %797 = vmatprep.subr.mxu0 0.0
    %798 = vmatpush1.msra.mxu0 0.0
    %799 = vmatprep.subr.mxu0 0.0
    %800 = vmatpush1.msra.mxu0 0.0
    %801 = vmatprep.subr.mxu0 0.0
    %802 = vmatpush1.msra.mxu0 0.0
    %803 = vmatprep.subr.mxu0 0.0
    %804 = vmatpush1.msra.mxu0 0.0
    %805 = vmatprep.subr.mxu0 0.0
    %806 = vmatpush1.msra.mxu0 0.0
    %807 = vmatprep.subr.mxu0 0.0
    %808 = vmatpush1.msra.mxu0 0.0
    %809 = vmatprep.mubr.f32.mxu0 0.0
    %810 = vmatmul.mubr.f32.gmra.mrb[0].mxu0 %v488
    %v811 = vpop.f32.mrb[0].mxu0
    %v812 = vadd.f32 0.0, %v811
    %v813 = vpop.f32.mrb[0].mxu0
    %814 = vmatprep.mubr.f32.mxu0 0.0
    %815 = vmatmul.mubr.f32.gmra.mrb[0].mxu0 %v491
    %v816 = vpop.f32.mrb[0].mxu0
    %v817 = vadd.f32 0.0, %v816
    %v818 = vpop.f32.mrb[0].mxu0
    %819 = vmatprep.mubr.f32.mxu0 0.0
    %820 = vmatmul.mubr.f32.gmra.mrb[0].mxu0 %v494
    %v821 = vpop.f32.mrb[0].mxu0
    %v822 = vadd.f32 0.0, %v821
    %v823 = vpop.f32.mrb[0].mxu0
    %824 = vdwg.mxu0
    %825 = vst [vmem:[#allocation5] sm:$0xff] %v563
    %826 = vst [vmem:[#allocation5 + $0x8] sm:$0xff] %v565
    %827 = vst [vmem:[#allocation5 + $0x10] sm:$0xff] %v646
    %828 = vst [vmem:[#allocation5 + $0x18] sm:$0xff] %v648
    %829 = vst [vmem:[#allocation5 + $0x20] sm:$0xff] %v729
    %830 = vst [vmem:[#allocation5 + $0x28] sm:$0xff] %v731
    %831 = vst.msk [vmem:[#allocation5 + $0x30] sm:$0xff] %vm79, %v812
    %832 = vst [vmem:[#allocation5 + $0x38] sm:$0xff] %v569
    %833 = vst [vmem:[#allocation5 + $0x40] sm:$0xff] %v571
    %834 = vst [vmem:[#allocation5 + $0x48] sm:$0xff] %v652
    %835 = vst [vmem:[#allocation5 + $0x50] sm:$0xff] %v654
    %836 = vst [vmem:[#allocation5 + $0x58] sm:$0xff] %v735
    %837 = vst [vmem:[#allocation5 + $0x60] sm:$0xff] %v737
    %838 = vst.msk [vmem:[#allocation5 + $0x68] sm:$0xff] %vm79, %v817
    %839 = vst [vmem:[#allocation5 + $0x70] sm:$0xff] %v575
    %840 = vst [vmem:[#allocation5 + $0x78] sm:$0xff] %v577
    %841 = vst [vmem:[#allocation5 + $0x80] sm:$0xff] %v658
    %842 = vst [vmem:[#allocation5 + $0x88] sm:$0xff] %v660
    %843 = vst [vmem:[#allocation5 + $0x90] sm:$0xff] %v741
    %844 = vst [vmem:[#allocation5 + $0x98] sm:$0xff] %v743
    %845 = vst.msk [vmem:[#allocation5 + $0xa0] sm:$0xff] %vm79, %v822
    // Predicated region
    $region22: #{tpu_custom_call.1} parent=1 // pred_check
      _
    $region23: #{tpu_custom_call.1} parent=1 // pred_check_branch
      %847 = sbr.rel (0) target = $region25
    $region24: #{tpu_custom_call.1} parent=1 // pred_region
      %s849 = ssub.s32 2688, 2688
      %850 = vsyncadd [#allocation4], %s849
      %s851 = sshll.u32 [#allocation5], 4
      %s852 = int_to_ptr.vmem [resolvable:$true] %s851
      %857 = dma.vmem_to_hbm [thread:$0]  %s852, 2688, %s4, [#allocation4], 896, 896, 56
    $region25: #{tpu_custom_call.1} parent=1 // pred_fallthru
      _
    // Predicated region
    $region26: #{tpu_custom_call.1} parent=1 // pred_check
      _
    $region27: #{tpu_custom_call.1} parent=1 // pred_check_branch
      %859 = sbr.rel (0) target = $region29
    $region28: #{tpu_custom_call.1} parent=1 // pred_region
      %860 = dma.done [#allocation4], 2688
    $region29: #{tpu_custom_call.1} parent=1 // pred_fallthru
      _
    %861 = vsyncpa [#allocation3], 1
    %862 = vsyncpa [#allocation4], 1

</llo_original>
